<compile_context>
chip_gen: v7x
topology: tpu7x:2x2x1
jax: 0.10.0
libtpu: 0.0.40
codegen_flags: <defaults>
</compile_context>

<pallas_src>
import jax
import jax.numpy as jnp
from jax.experimental import pallas as pl
from jax.experimental.pallas import tpu as pltpu


def _linear_relu_kernel(params_ref, x_ref, o_ref):
    # params_ref: SMEM f32[3] = (w0, w1, b)
    # x_ref:      VMEM f32[2, TILE_B]  (feature-major)
    # o_ref:      VMEM f32[1, TILE_B]
    w0 = params_ref[0]
    w1 = params_ref[1]
    b = params_ref[2]
    # Full-f32 VPU FMAs; scalars broadcast over the lane-dense (1, TILE_B) vregs.
    y = x_ref[0:1, :] * w0 + x_ref[1:2, :] * w1 + b
    o_ref[...] = jnp.maximum(y, 0.0)


def quantization_acc_estimator(x, weight, bias, *, tile_b=1024):
    """relu(x @ W^T + b).

    x:      (B, 2)  float32
    weight: (1, 2)  float32   (PyTorch nn.Linear weight layout)
    bias:   (1,)    float32
    returns (B, 1)  float32
    """
    B = x.shape[0]
    x = x.astype(jnp.float32)

    # Lane-dense tile: multiple of 128, clamped so tiny batches don't over-pad.
    tile = min(tile_b, 128 * pl.cdiv(B, 128))
    n_tiles = pl.cdiv(B, tile)
    b_pad = tile * n_tiles

    # Feature-major, zero-padded batch (padding is sliced off afterwards).
    x_t = jnp.zeros((2, b_pad), jnp.float32).at[:, :B].set(x.T)

    # (w0, w1, b) as SMEM scalars.
    params = jnp.concatenate(
        [weight.reshape(-1), bias.reshape(-1)]
    ).astype(jnp.float32)  # shape (3,)

    out_t = pl.pallas_call(
        _linear_relu_kernel,
        out_shape=jax.ShapeDtypeStruct((1, b_pad), jnp.float32),
        grid=(n_tiles,),
        in_specs=[
            pl.BlockSpec(memory_space=pltpu.MemorySpace.SMEM),   # params (whole array)
            pl.BlockSpec((2, tile), lambda i: (0, i)),           # x, feature-major tile
        ],
        out_specs=pl.BlockSpec((1, tile), lambda i: (0, i)),     # lane-dense output
        compiler_params=pltpu.CompilerParams(
            dimension_semantics=("parallel",),   # shard batch across TCs on v7x
        ),
    )(params, x_t)

    return out_t[0, :B].reshape(B, 1)


def init_params(key):
    """Deterministic re-implementation of QuantizationAccEstimator._initialize_weights."""
    kw, kb = jax.random.split(key)
    # nn.init.normal_(weight, 0, 0.01); weight shape (out=1, in=2)
    w = 0.01 * jax.random.normal(kw, (1, 2), dtype=jnp.float32)
    # weight.data[0] = weight.data[0] - 130000  (row 0 is the whole weight)
    w = w.at[0].add(-130000.0)
    # default nn.Linear bias init: U(-1/sqrt(fan_in), 1/sqrt(fan_in)), fan_in=2
    bound = 1.0 / jnp.sqrt(2.0)
    b = jax.random.uniform(kb, (1,), dtype=jnp.float32, minval=-bound, maxval=bound)
    return w, b


if __name__ == "__main__":
    key = jax.random.PRNGKey(0)
    k_x, k_p = jax.random.split(key)

    # Small deterministic input: batch=8, features=2 (what nn.Linear(2,1) implies).
    # NOTE: at B=8 this is pure pallas_call overhead; the kernel pays off for
    # large batches (the grid/tiling here is built for that case).
    B = 8
    x = jax.random.normal(k_x, (B, 2), dtype=jnp.float32)
    weight, bias = init_params(k_p)

    out = quantization_acc_estimator(x, weight, bias)
    out = jax.block_until_ready(out)

    # Reference in plain JAX, full-f32 elementwise math (no MXU bf16 pass).
    ref = jnp.maximum(
        x[:, 0:1] * weight[0, 0] + x[:, 1:2] * weight[0, 1] + bias[0], 0.0
    )
    assert out.shape == (B, 1)
    assert jnp.allclose(out, ref, rtol=1e-6, atol=1e-5), (out, ref)

    print("KERNEL_OK")
</pallas_src>

<mosaic_0001>
module attributes {stable_mosaic.version = 11 : i64} {
  func.func @_linear_relu_kernel(%arg0: i32, %arg1: memref<3xf32, #tpu.memory_space<smem>>, %arg2: memref<2x128xf32, #tpu.memory_space<vmem>>, %arg3: memref<1x128xf32, #tpu.memory_space<vmem>>) attributes {dimension_semantics = [#tpu.dimension_semantics<parallel>], iteration_bounds = array<i64: 1>, scalar_prefetch = 0 : i64, scratch_operands = 0 : i64, tpu.core_type = #tpu.core_type<tc>, window_params = [{transform_indices = @transform_0, window_bounds = array<i64: 3>}, {transform_indices = @transform_1, window_bounds = array<i64: 2, 128>}, {transform_indices = @transform_2, window_bounds = array<i64: 1, 128>}]} {
    %c0 = arith.constant 0 : index
    %0 = memref.load %arg1[%c0] : memref<3xf32, #tpu.memory_space<smem>>
    %c1 = arith.constant 1 : index
    %1 = memref.load %arg1[%c1] : memref<3xf32, #tpu.memory_space<smem>>
    %c2 = arith.constant 2 : index
    %2 = memref.load %arg1[%c2] : memref<3xf32, #tpu.memory_space<smem>>
    %c0_0 = arith.constant 0 : index
    %c0_1 = arith.constant 0 : index
    %3 = vector.load %arg2[%c0_0, %c0_1] : memref<2x128xf32, #tpu.memory_space<vmem>>, vector<1x128xf32>
    %4 = vector.broadcast %0 : f32 to vector<1x128xf32>
    %5 = arith.mulf %3, %4 : vector<1x128xf32>
    %c1_2 = arith.constant 1 : index
    %c0_3 = arith.constant 0 : index
    %6 = vector.load %arg2[%c1_2, %c0_3] : memref<2x128xf32, #tpu.memory_space<vmem>>, vector<1x128xf32>
    %7 = vector.broadcast %1 : f32 to vector<1x128xf32>
    %8 = arith.mulf %6, %7 : vector<1x128xf32>
    %9 = arith.addf %5, %8 : vector<1x128xf32>
    %10 = vector.broadcast %2 : f32 to vector<1x128xf32>
    %11 = arith.addf %9, %10 : vector<1x128xf32>
    %cst = arith.constant 0.000000e+00 : f32
    %12 = vector.broadcast %cst : f32 to vector<1x128xf32>
    %13 = arith.maximumf %11, %12 : vector<1x128xf32>
    %c0_4 = arith.constant 0 : index
    %c0_5 = arith.constant 0 : index
    %14 = vector.load %arg3[%c0_4, %c0_5] : memref<1x128xf32, #tpu.memory_space<vmem>>, vector<1x128xf32>
    tpu.vector_store %arg3[%c0_4, %c0_5], %13 {strides = array<i32>} : memref<1x128xf32, #tpu.memory_space<vmem>>, vector<1x128xf32>,
    return
  }
  func.func @transform_0(%arg0: i32) -> i32 {
    %c0_i32 = arith.constant 0 : i32
    %c0_i32_0 = arith.constant 0 : i32
    return %c0_i32 : i32
  }
  func.func @transform_1(%arg0: i32) -> (i32, i32) {
    %c0_i32 = arith.constant 0 : i32
    %c0_i32_0 = arith.constant 0 : i32
    return %c0_i32, %arg0 : i32, i32
  }
  func.func @transform_2(%arg0: i32) -> (i32, i32) {
    %c0_i32 = arith.constant 0 : i32
    %c0_i32_0 = arith.constant 0 : i32
    return %c0_i32, %arg0 : i32, i32
  }
}

</mosaic_0001>

<llo_original>
// kernel: tpu_custom_call.1
$region0: #{tpu_custom_call.1}
  #allocation0 [shape = 'u32[]', space=smem, size = 0x4, offset = 0x4, fixed_abs, tag = 'smem constant byte address 0x4 - core index']
  #allocation1 [shape = 'u32[144,128]{1,0:T(1,128)}', space=vmem, size = 0x12000, scoped, tag = 'internal scratch']
  %s0 = inlined_call_operand.hbm [shape: f32[3], index: 0, kind: input, shape index: {}]
  %s1 = inlined_call_operand.vmem [shape: f32[2,128], index: 1, kind: input, shape index: {}]
  %s2 = inlined_call_operand.hbm [shape: f32[1,128], index: 2, kind: output, shape index: {}]
  %s3 = sld [smem:[#allocation0]]
  $region22: #{tpu_custom_call.1} parent=0
    _
  %s5 = ssub.s32 1, %s3
  %s6 = scalar_select 0, %s5, %s3
  $region1: #{tpu_custom_call.1} parent=0
    #allocation2 [shape = 'u8[512]{0}', space=smem, size = 0x200, scoped, tag = 'input window, operand 0, single buffered']
    #allocation3 [shape = 's32[1]{0}', space=sflag, size = 0x4, scoped, tag = 'scoped memory for tpu_custom_call.1']
    #allocation4 [shape = 's32[1]{0}', space=sflag, size = 0x4, scoped, tag = 'scoped memory for tpu_custom_call.1']
    #allocation5 [shape = 'u8[512]{0}', space=vmem, size = 0x400, scoped, tag = 'output window, operand 0, single buffered']
    %7 = vsyncpa [#allocation4], 0
    %8 = vsyncpa [#allocation3], 0
    // Predicated region
    $region2: #{tpu_custom_call.1} parent=1 // pred_check
      _
    $region3: #{tpu_custom_call.1} parent=1 // pred_check_branch
      %10 = sbr.rel (0) target = $region5
    $region4: #{tpu_custom_call.1} parent=1 // pred_region
      %s12 = ssub.s32 16, 16
      %13 = vsyncadd [#allocation4], %s12
      %16 = dma.hbm_to_smem %s0, 16, [#allocation2], [#allocation4]
    $region5: #{tpu_custom_call.1} parent=1 // pred_fallthru
      _
    // Predicated region
    $region6: #{tpu_custom_call.1} parent=1 // pred_check
      _
    $region7: #{tpu_custom_call.1} parent=1 // pred_check_branch
      %18 = sbr.rel (0) target = $region9
    $region8: #{tpu_custom_call.1} parent=1 // pred_region
      _
    $region9: #{tpu_custom_call.1} parent=1 // pred_fallthru
      _
    // Predicated region
    $region10: #{tpu_custom_call.1} parent=1 // pred_check
      _
    $region11: #{tpu_custom_call.1} parent=1 // pred_check_branch
      %20 = sbr.rel (0) target = $region13
    $region12: #{tpu_custom_call.1} parent=1 // pred_region
      %21 = dma.done [#allocation4], 16
    $region13: #{tpu_custom_call.1} parent=1 // pred_fallthru
      _
    %22 = sfence
    %s23 = sld [smem:[#allocation2]]
    %s24 = sld [smem:[#allocation2 + $0x1]]
    %s25 = sld [smem:[#allocation2 + $0x2]]
    %v26 = vld [vmem:[%s1] sm:$0x1]
    %v27 = vstv %s23
    %v28 = vmul.f32 %v26, %v27
    %v29 = vld [vmem:[%s1 + $0x1] sm:$0x1]
    %v30 = vstv %s24
    %v31 = vmul.f32 %v29, %v30
    %v32 = vadd.f32 %v28, %v31
    %v33 = vstv %s25
    %v34 = vadd.f32 %v32, %v33
    %v35 = vmax.f32 %v34, 0.0
    %36 = vst [vmem:[#allocation5] sm:$0x1] %v35
    // Predicated region
    $region14: #{tpu_custom_call.1} parent=1 // pred_check
      _
    $region15: #{tpu_custom_call.1} parent=1 // pred_check_branch
      %38 = sbr.rel (0) target = $region17
    $region16: #{tpu_custom_call.1} parent=1 // pred_region
      %s40 = ssub.s32 16, 16
      %41 = vsyncadd [#allocation3], %s40
      %s43 = sshll.u32 [#allocation5], 4
      %s44 = int_to_ptr.vmem [resolvable:$true] %s43
      %46 = dma.vmem_to_hbm [thread:$0]  %s44, 16, %s2, [#allocation3]
    $region17: #{tpu_custom_call.1} parent=1 // pred_fallthru
      _
    // Predicated region
    $region18: #{tpu_custom_call.1} parent=1 // pred_check
      _
    $region19: #{tpu_custom_call.1} parent=1 // pred_check_branch
      %48 = sbr.rel (0) target = $region21
    $region20: #{tpu_custom_call.1} parent=1 // pred_region
      %49 = dma.done [#allocation3], 16
    $region21: #{tpu_custom_call.1} parent=1 // pred_fallthru
      _
    %50 = vsyncpa [#allocation3], 1
    %51 = vsyncpa [#allocation4], 1

</llo_original>
